<compile_context>
chip_gen: v5e
topology: v5e:2x2
jax: 0.10.0
libtpu: 0.0.40
codegen_flags: <defaults>
</compile_context>

<pallas_src>
import functools

import jax
import jax.numpy as jnp
from jax.experimental import pallas as pl
from jax.experimental.pallas import tpu as pltpu

ALPHA = 0.35                     # sym_model(alpha=0.35)
LANES = 128
TARGET_BLOCK_ROWS = 1024         # ~512 KiB f32 block: past the ~85%-of-roofline knee
MIN_SPLIT_BLOCK_ROWS = 256       # don't split into extra grid steps below this height

_SELU_ALPHA = 1.6732632423543772
_SELU_SCALE = 1.0507009873554805


# ----------------------------- elementwise math -----------------------------

def _snake_f32(x):
    # x + (1 - cos(2*a*x)) / (2*a)  ==  x + sin(a*x)^2 / a
    # (exact identity; divide-free and better conditioned in low precision)
    s = jnp.sin(jnp.float32(ALPHA) * x)
    return x + (s * s) * jnp.float32(1.0 / ALPHA)


def _selu_f32(x):
    # nn.SELU(): scale * (max(0,x) + min(0, alpha*(exp(x)-1)))
    neg = jnp.float32(_SELU_ALPHA) * (jnp.exp(x) - jnp.float32(1.0))
    return jnp.float32(_SELU_SCALE) * jnp.where(x > 0, x, neg)


def _elementwise_kernel(x_ref, o_ref, *, fn):
    x = x_ref[...].astype(jnp.float32)
    o_ref[...] = fn(x).astype(o_ref.dtype)


def _apply_jnp(x, fn):
    # Fused-XLA fallback (same math); used for tiny / non-lane-divisible sizes.
    return fn(x.astype(jnp.float32)).astype(x.dtype)


# ------------------------------ tiling policy -------------------------------

def _sublane_tile(dtype):
    itemsize = jnp.dtype(dtype).itemsize
    return 8 * max(1, 4 // itemsize)        # f32 -> 8, bf16 -> 16, int8/fp8 -> 32


def _pick_block_rows(rows, sublane):
    """Rows per block for a (rows, 128) slab."""
    if rows >= 4 * TARGET_BLOCK_ROWS:
        # Large: ~TARGET-row blocks; even step count so both v7x TensorCores
        # stream equal bytes; >=4 steps hides prologue/epilogue DMA.
        n_steps = pl.cdiv(rows, TARGET_BLOCK_ROWS)
        n_steps += n_steps % 2
    elif rows >= 4 * MIN_SPLIT_BLOCK_ROWS:
        n_steps = 4
    elif rows >= 2 * MIN_SPLIT_BLOCK_ROWS:
        n_steps = 2
    else:
        # Small: a single full-extent block (always a legal block shape);
        # extra steps only add fixed per-step overhead on 1-TC chips.
        return rows
    block_rows = pl.cdiv(rows, n_steps)
    return pl.cdiv(block_rows, sublane) * sublane


# ------------------------------ pallas launcher ------------------------------

def _elementwise_2d(x2d, fn, flops_per_elem, transc_per_elem):
    rows = x2d.shape[0]
    sublane = _sublane_tile(x2d.dtype)
    block_rows = _pick_block_rows(rows, sublane)
    grid = (pl.cdiv(rows, block_rows),)     # final partial block masked by Pallas
    n = x2d.size
    itemsize = jnp.dtype(x2d.dtype).itemsize

    return pl.pallas_call(
        functools.partial(_elementwise_kernel, fn=fn),
        out_shape=jax.ShapeDtypeStruct(x2d.shape, x2d.dtype),
        grid_spec=pltpu.PrefetchScalarGridSpec(
            num_scalar_prefetch=0,
            grid=grid,
            in_specs=[pl.BlockSpec((block_rows, LANES), lambda i: (i, 0))],
            out_specs=pl.BlockSpec((block_rows, LANES), lambda i: (i, 0)),
        ),
        compiler_params=pltpu.CompilerParams(
            # "parallel" lets the grid shard across both v7x TensorCores;
            # a no-op on single-TC v5e/v6e.
            dimension_semantics=("parallel",),
        ),
        cost_estimate=pl.CostEstimate(
            flops=flops_per_elem * n,
            transcendentals=transc_per_elem * n,
            bytes_accessed=2 * n * itemsize,
        ),
    )(x2d)


def _apply_elementwise(x, fn, flops_per_elem, transc_per_elem):
    orig_shape = x.shape
    flat = x.reshape(-1)
    n = flat.shape[0]
    if n < 8 * LANES or n % LANES != 0:
        # Tiny or not lane-divisible: one fused XLA pass (1 read + 1 write)
        # beats any kernel + tail-stitch copies.
        return _apply_jnp(flat, fn).reshape(orig_shape)
    out = _elementwise_2d(flat.reshape(n // LANES, LANES), fn,
                          flops_per_elem, transc_per_elem)
    return out.reshape(orig_shape)


# -------------------------------- public API ---------------------------------

def snake(x):
    """Snake activation (alpha=0.35), elementwise over any-shape array."""
    return _apply_elementwise(x, _snake_f32, flops_per_elem=5, transc_per_elem=1)


def selu(x):
    """SELU (the inter-layer activation of sym_model's CNN stacks)."""
    return _apply_elementwise(x, _selu_f32, flops_per_elem=5, transc_per_elem=1)


def snake_ref(x):
    # Pure-JAX reference matching the PyTorch formula exactly.
    return x + (1.0 - jnp.cos(2.0 * ALPHA * x)) / (2.0 * ALPHA)


# ----------------------------------- test ------------------------------------

if __name__ == "__main__":
    key = jax.random.PRNGKey(0)
    # NCHW lattice state consistent with sym_model's 2-D path (batch=2, Dp=2
    # spin channels, 16x16 lattice), plus a P4M-conv-shaped intermediate
    # activation (batch, F, 8 group elements, H, W) for the SELU kernel.
    x = jax.random.normal(key, (2, 2, 16, 16), dtype=jnp.float32)
    feat = jax.random.normal(jax.random.fold_in(key, 1), (2, 4, 8, 16, 16),
                             dtype=jnp.float32)

    y = snake(x)
    z = selu(feat)
    jax.block_until_ready((y, z))

    assert y.shape == x.shape and y.dtype == x.dtype
    assert z.shape == feat.shape and z.dtype == feat.dtype
    assert jnp.allclose(y, snake_ref(x), atol=1e-5, rtol=1e-5), "snake mismatch"
    assert jnp.allclose(z, jax.nn.selu(feat), atol=1e-5, rtol=1e-5), "selu mismatch"

    print("KERNEL_OK")
</pallas_src>

<mosaic_0001>
module attributes {stable_mosaic.version = 11 : i64} {
  func.func @_elementwise_kernel(%arg0: i32, %arg1: memref<8x128xf32, #tpu.memory_space<vmem>>, %arg2: memref<8x128xf32, #tpu.memory_space<vmem>>) attributes {dimension_semantics = [#tpu.dimension_semantics<parallel>], iteration_bounds = array<i64: 1>, scalar_prefetch = 0 : i64, scratch_operands = 0 : i64, tpu.core_type = #tpu.core_type<tc>, window_params = [{transform_indices = @transform_0, window_bounds = array<i64: 8, 128>}, {transform_indices = @transform_1, window_bounds = array<i64: 8, 128>}]} {
    %c0 = arith.constant 0 : index
    %c0_0 = arith.constant 0 : index
    %0 = vector.load %arg1[%c0, %c0_0] : memref<8x128xf32, #tpu.memory_space<vmem>>, vector<8x128xf32>
    %cst = arith.constant 3.500000e-01 : f32
    %1 = vector.broadcast %cst : f32 to vector<8x128xf32>
    %2 = arith.mulf %1, %0 : vector<8x128xf32>
    %3 = math.sin %2 : vector<8x128xf32>
    %4 = arith.mulf %3, %3 : vector<8x128xf32>
    %cst_1 = arith.constant 2.85714293 : f32
    %5 = vector.broadcast %cst_1 : f32 to vector<8x128xf32>
    %6 = arith.mulf %4, %5 : vector<8x128xf32>
    %7 = arith.addf %0, %6 : vector<8x128xf32>
    %c0_2 = arith.constant 0 : index
    %c0_3 = arith.constant 0 : index
    %8 = vector.load %arg2[%c0_2, %c0_3] : memref<8x128xf32, #tpu.memory_space<vmem>>, vector<8x128xf32>
    tpu.vector_store %arg2[%c0_2, %c0_3], %7 {strides = array<i32>} : memref<8x128xf32, #tpu.memory_space<vmem>>, vector<8x128xf32>,
    return
  }
  func.func @transform_0(%arg0: i32) -> (i32, i32) {
    %c0_i32 = arith.constant 0 : i32
    %c0_i32_0 = arith.constant 0 : i32
    return %arg0, %c0_i32 : i32, i32
  }
  func.func @transform_1(%arg0: i32) -> (i32, i32) {
    %c0_i32 = arith.constant 0 : i32
    %c0_i32_0 = arith.constant 0 : i32
    return %arg0, %c0_i32 : i32, i32
  }
}

</mosaic_0001>

<llo_original>
// kernel: tpu_custom_call.1
$region0: #{tpu_custom_call.1}
  #allocation0 [shape = 'u32[]', space=smem, size = 0x4, offset = 0x4, fixed_abs, tag = 'smem constant byte address 0x4 - core index']
  #allocation1 [shape = 'u32[72,128]{1,0:T(1,128)}', space=vmem, size = 0x9000, scoped, tag = 'internal scratch']
  %s0 = inlined_call_operand.hbm [shape: f32[8,128], index: 0, kind: input, shape index: {}]
  %s1 = inlined_call_operand.hbm [shape: f32[8,128], index: 1, kind: output, shape index: {}]
  %s2 = sld [smem:[#allocation0]]
  $region18: #{tpu_custom_call.1} parent=0
    _
  %s4 = ssub.s32 1, %s2
  %s5 = scalar_select 0, %s4, %s2
  $region1: #{tpu_custom_call.1} parent=0
    #allocation2 [shape = 'u8[4096]{0}', space=vmem, size = 0x1000, scoped, tag = 'input window, operand 0, single buffered']
    #allocation3 [shape = 's32[1]{0}', space=sflag, size = 0x4, scoped, tag = 'scoped memory for tpu_custom_call.1']
    #allocation4 [shape = 's32[1]{0}', space=sflag, size = 0x4, scoped, tag = 'scoped memory for tpu_custom_call.1']
    #allocation5 [shape = 'u8[4096]{0}', space=vmem, size = 0x1000, scoped, tag = 'output window, operand 0, single buffered']
    %6 = vsyncpa [#allocation3], 0
    %7 = vsyncpa [#allocation4], 0
    // Predicated region
    $region2: #{tpu_custom_call.1} parent=1 // pred_check
      _
    $region3: #{tpu_custom_call.1} parent=1 // pred_check_branch
      %9 = sbr.rel (0) target = $region5
    $region4: #{tpu_custom_call.1} parent=1 // pred_region
      %11 = vsyncadd [#allocation3], 0
      %s13 = sshll.u32 %s0, 4
      %s14 = int_to_ptr.hbm [resolvable:$true] %s13
      %s15 = sshll.u32 [#allocation2], 4
      %s16 = int_to_ptr.vmem [resolvable:$true] %s15
      %18 = dma.hbm_to_vmem [thread:$0]  %s14, 128, %s16, [#allocation3]
    $region5: #{tpu_custom_call.1} parent=1 // pred_fallthru
      _
    // Predicated region
    $region6: #{tpu_custom_call.1} parent=1 // pred_check
      _
    $region7: #{tpu_custom_call.1} parent=1 // pred_check_branch
      %20 = sbr.rel (0) target = $region9
    $region8: #{tpu_custom_call.1} parent=1 // pred_region
      %22 = dma.done [#allocation3], 128
    $region9: #{tpu_custom_call.1} parent=1 // pred_fallthru
      _
    %v23 = vld [vmem:[#allocation2] sm:$0xff]
    %v24 = vmul.f32 %v23, 0.35
    %v25 = vand.u32 2147483647, %v24
    %vm26 = vcmp.le.f32.partialorder %v25, 0.7853982
    %vm27 = vcmp.lt.s32.totalorder %v24, 0
    %v28 = vand.u32 %v24, 2139095040
    %v29 = vshrl.u32 %v28, 23
    %v30 = vsub.s32 %v29, 127
    %v31 = vand.u32 2147483647, %v24
    %v32 = vand.u32 %v31, 8388607
    %v33 = vor.u32 %v32, 8388608
    %v34 = vsub.s32 0, %v33
    %v35 = vadd.s32 %v30, 1
    %vm36 = vcmp.gt.s32.totalorder %v35, 0
    %v37 = vsel %vm36, %v35, 0
    %v38 = vshrl.u32 %v37, 5
    %v39 = vand.u32 %v37, 31
    %v40 = vsub.s32 32, %v39
    %v41 = vshrl.u32 683565275, %v40
    %v42 = vshll.u32 683565275, %v39
    %v43 = vshrl.u32 2475754826, %v40
    %v44 = vor.u32 %v42, %v43
    %v45 = vshll.u32 2475754826, %v39
    %v46 = vshrl.u32 2131351028, %v40
    %v47 = vor.u32 %v45, %v46
    %v48 = vshll.u32 2131351028, %v39
    %v49 = vshrl.u32 2102212464, %v40
    %v50 = vor.u32 %v48, %v49
    %v51 = vshll.u32 2102212464, %v39
    %v52 = vshrl.u32 920167782, %v40
    %v53 = vor.u32 %v51, %v52
    %v54 = vshll.u32 920167782, %v39
    %v55 = vshrl.u32 1326507024, %v40
    %v56 = vor.u32 %v54, %v55
    %vm57 = vcmp.lt.s32.totalorder %v38, 1
    %vm58 = vcmp.lt.s32.totalorder %v38, 2
    %vm59 = vcmp.lt.s32.totalorder %v38, 3
    %vm60 = vcmp.lt.s32.totalorder %v38, 4
    %v61 = vsel %vm57, %v41, %v44
    %v62 = vsel %vm60, %v50, 2102212464
    %v63 = vsel %vm59, %v47, %v62
    %v64 = vsel %vm58, %v61, %v63
    %v65 = vsel %vm57, %v44, %v47
    %v66 = vsel %vm60, %v53, 920167782
    %v67 = vsel %vm59, %v50, %v66
    %v68 = vsel %vm58, %v65, %v67
    %v69 = vsel %vm57, %v47, %v50
    %v70 = vsel %vm60, %v56, 1326507024
    %v71 = vsel %vm59, %v53, %v70
    %v72 = vsel %vm58, %v69, %v71
    %v73 = vshll.u32 %v33, 8
    %v74 = vand.u32 %v73, 65535
    %v75 = vshrl.u32 %v73, 16
    %v76 = vand.u32 %v72, 65535
    %v77 = vshrl.u32 %v72, 16
    %v78 = vmul.u32 %v74, %v76
    %v79 = vmul.u32 %v74, %v77
    %v80 = vmul.u32 %v75, %v76
    %v81 = vmul.u32 %v75, %v77
    %v82 = vshll.u32 %v79, 16
    %v83 = vshrl.u32 %v79, 16
    %v84 = vshll.u32 %v80, 16
    %v85 = vshrl.u32 %v80, 16
    %vm86 = vc.u32 %v78, %v82
    %v87 = vsel %vm86, 1, 0
    %v88 = vadd.s32 %v78, %v82
    %v89 = vadd.s32 %v81, %v87
    %vm90 = vc.u32 %v88, %v84
    %v91 = vsel %vm90, 1, 0
    %v92 = vadd.s32 %v88, %v84
    %v93 = vadd.s32 %v89, %v91
    %v94 = vadd.s32 %v93, %v83
    %v95 = vadd.s32 %v94, %v85
    %v96 = vand.u32 %v73, 65535
    %v97 = vshrl.u32 %v73, 16
    %v98 = vand.u32 %v68, 65535
    %v99 = vshrl.u32 %v68, 16
    %v100 = vmul.u32 %v96, %v98
    %v101 = vmul.u32 %v96, %v99
    %v102 = vmul.u32 %v97, %v98
    %v103 = vmul.u32 %v97, %v99
    %v104 = vshll.u32 %v101, 16
    %v105 = vshrl.u32 %v101, 16
    %v106 = vshll.u32 %v102, 16
    %v107 = vshrl.u32 %v102, 16
    %vm108 = vc.u32 %v100, %v104
    %v109 = vsel %vm108, 1, 0
    %v110 = vadd.s32 %v100, %v104
    %v111 = vadd.s32 %v103, %v109
    %vm112 = vc.u32 %v110, %v106
    %v113 = vsel %vm112, 1, 0
    %v114 = vadd.s32 %v110, %v106
    %v115 = vadd.s32 %v111, %v113
    %v116 = vadd.s32 %v115, %v105
    %v117 = vadd.s32 %v116, %v107
    %v118 = vmul.u32 %v73, %v64
    %v119 = vadd.s32 %v95, %v114
    %vm120 = vc.u32 %v95, %v114
    %v121 = vadd.s32 %v117, 1
    %v122 = vsel %vm120, %v121, %v117
    %v123 = vadd.s32 %v118, %v122
    %v124 = vadd.s32 %v123, 536870912
    %v125 = vshrl.u32 %v124, 30
    %v126 = vshll.u32 %v125, 30
    %v127 = vsub.s32 %v123, %v126
    %vm128 = vcmp.lt.s32.totalorder %v127, 0
    %v129 = vsub.s32 0, %v127
    %v130 = vsel %vm128, %v129, %v127
    %v131 = vclz %v130
    %v132 = vsub.s32 %v131, 2
    %vm133 = vcmp.gt.s32.totalorder 0, %v132
    %v134 = vsel %vm133, 0, %v132
    %v135 = vsub.s32 32, %v134
    %v136 = vshll.u32 %v127, %v134
    %v137 = vshrl.u32 %v119, %v135
    %v138 = vor.u32 %v136, %v137
    %v139 = vsub.s32 4294967266, %v134
    %v140 = vadd.s32 %v139, 127
    %v141 = vshll.u32 %v140, 23
    %v142 = vor.u32 4788187, %v141
    %v143 = vand.u32 2147483647, %v142
    %v145 = vcvt.s32.f32 %v138
    %v146 = vmul.f32 %v145, %v143
    %v147 = vxor.u32 %v146, 2147483648
    %v148 = vsel %vm27, %v147, %v146
    %v149 = vsub.s32 4, %v125
    %v150 = vsel %vm27, %v149, %v125
    %v151 = vsel %vm26, %v24, %v148
    %v152 = vsel %vm26, 0, %v150
    %v153 = vmul.f32 %v151, %v151
    %v154 = vmul.f32 %v153, -0.001358992
    %v155 = vadd.f32 %v154, 0.041655596
    %v156 = vmul.f32 %v153, %v155
    %v157 = vadd.f32 %v156, -0.4999988
    %v158 = vmul.f32 %v153, %v157
    %v159 = vadd.f32 1.0, %v158
    %v160 = vmul.f32 %v151, %v151
    %v161 = vmul.f32 %v160, -0.00019511016
    %v162 = vadd.f32 %v161, 0.008332121
    %v163 = vmul.f32 %v160, %v162
    %v164 = vadd.f32 %v163, -0.16666654
    %v165 = vmul.f32 %v160, %v164
    %v166 = vadd.f32 %v165, 1.0
    %v167 = vmul.f32 %v166, %v151
    %vm168 = vweird.f32 %v24
    %v169 = vadd.s32 %v152, 3
    %v170 = vand.u32 %v169, 3
    %vm171 = vcmp.lt.s32.totalorder %v170, 2
    %vm172 = vcmp.eq.s32.totalorder %v170, 0
    %v173 = vxor.u32 %v167, 2147483648
    %v174 = vsel %vm172, %v159, %v173
    %vm175 = vcmp.eq.s32.totalorder %v170, 2
    %v176 = vxor.u32 %v159, 2147483648
    %v177 = vsel %vm175, %v176, %v167
    %v178 = vsel %vm171, %v174, %v177
    %v179 = vsel %vm168, nan, %v178
    %v180 = vmul.f32 %v179, %v179
    %v181 = vmul.f32 %v180, 2.857143
    %v182 = vadd.f32 %v23, %v181
    %183 = vst [vmem:[#allocation5] sm:$0xff] %v182
    // Predicated region
    $region10: #{tpu_custom_call.1} parent=1 // pred_check
      _
    $region11: #{tpu_custom_call.1} parent=1 // pred_check_branch
      %185 = sbr.rel (0) target = $region13
    $region12: #{tpu_custom_call.1} parent=1 // pred_region
      %187 = vsyncadd [#allocation4], 0
      %s189 = sshll.u32 [#allocation5], 4
      %s190 = int_to_ptr.vmem [resolvable:$true] %s189
      %s191 = sshll.u32 %s1, 4
      %s192 = int_to_ptr.hbm [resolvable:$true] %s191
      %194 = dma.vmem_to_hbm [thread:$0]  %s190, 128, %s192, [#allocation4]
    $region13: #{tpu_custom_call.1} parent=1 // pred_fallthru
      _
    // Predicated region
    $region14: #{tpu_custom_call.1} parent=1 // pred_check
      _
    $region15: #{tpu_custom_call.1} parent=1 // pred_check_branch
      %196 = sbr.rel (0) target = $region17
    $region16: #{tpu_custom_call.1} parent=1 // pred_region
      %198 = dma.done [#allocation4], 128
    $region17: #{tpu_custom_call.1} parent=1 // pred_fallthru
      _
    %199 = vsyncpa [#allocation3], 1
    %200 = vsyncpa [#allocation4], 1

</llo_original>
